<compile_context>
chip_gen: v7x
topology: tpu7x:2x2x1
jax: 0.10.0
libtpu: 0.0.40
codegen_flags: <defaults>
</compile_context>

<pallas_src>
import functools

import numpy as np
import jax
import jax.numpy as jnp
from jax import lax
from jax.experimental import pallas as pl
from jax.experimental.pallas import tpu as pltpu

N_EMBD = 16
BLOCK_SIZE = 2   # max sequence length (size of the tril buffer)
HEAD_SIZE = 8


def _head_kernel(x_ref, wq_ref, wk_ref, wv_ref, mask_ref, o_ref, *, scale):
    # x_ref: (B*T, C); w*_ref: (C, H); mask_ref: (B*T, B*T) of {0,1}; o_ref: (B*T, H).
    x = x_ref[...]

    # Projections for all tokens of all batches; separate weight refs keep every
    # MXU operand tile-aligned (no lane-offset slicing of a fused weight).
    q = jnp.dot(x, wq_ref[...], preferred_element_type=jnp.float32)   # (N, H)
    k = jnp.dot(x, wk_ref[...], preferred_element_type=jnp.float32)   # (N, H)
    v = jnp.dot(x, wv_ref[...], preferred_element_type=jnp.float32)   # (N, H)

    # All-pairs scores in a single MXU pass, contracting the head dim of k
    # directly (no transpose materialization). Scale uses C = n_embd per the module.
    wei = lax.dot_general(
        q, k, (((1,), (1,)), ((), ())), preferred_element_type=jnp.float32
    ) * scale                                                          # (N, N)

    # Combined block-diagonal (same-batch) AND causal mask. The diagonal is always
    # kept, so the row max stays finite and -inf is safe here.
    wei = jnp.where(mask_ref[...] > 0, wei, -jnp.inf)

    # Numerically-stable softmax with exact normalization (approx reciprocal buys
    # nothing at one row of work; keeps bit-closer parity with the reference).
    wei = wei - jnp.max(wei, axis=-1, keepdims=True)
    e = jnp.exp(wei)
    p = e / jnp.sum(e, axis=-1, keepdims=True)

    # Masked entries of p are exactly 0, so one full-slab PV matmul equals the
    # per-batch computation. Dropout(p=0.0) is the identity.
    # Single lane/sublane-dense store of the whole output slab.
    o_ref[...] = jnp.dot(p, v, preferred_element_type=jnp.float32).astype(o_ref.dtype)


def head_forward(x, wk, wq, wv):
    """x: (B, T, C) f32; wk/wq/wv: (C, H) (pre-transposed nn.Linear weights) -> (B, T, H)."""
    B, T, C = x.shape
    H = wk.shape[1]
    N = B * T

    # Wrapper-side layout plumbing (free under XLA): flatten tokens into one slab.
    x2d = x.reshape(N, C)

    # Trace-time constant mask: the module's `tril` buffer, extended block-diagonally
    # across the flattened batch dimension. Built with NumPy -> zero runtime cost.
    row = np.arange(N)[:, None]
    col = np.arange(N)[None, :]
    mask_np = ((row // T) == (col // T)) & ((row % T) >= (col % T))
    mask = jnp.asarray(mask_np, dtype=jnp.float32)

    kernel = functools.partial(_head_kernel, scale=C ** (-0.5))

    # TODO(synk): for large T this whole-slab kernel must become a flash-style grid
    # (q-token tiles x kv tiles with online-softmax scratch), with blocks re-derived
    # for per-generation VMEM (64 MiB on v7x), bf16 MXU operands on v6e/v7x, and
    # "parallel" dimension_semantics on the batch/q-tile axis for v7x's 2 TensorCores.
    out2d = pl.pallas_call(
        kernel,
        out_shape=jax.ShapeDtypeStruct((N, H), x.dtype),
        in_specs=[pl.BlockSpec(memory_space=pltpu.MemorySpace.VMEM)] * 5,
        out_specs=pl.BlockSpec(memory_space=pltpu.MemorySpace.VMEM),
    )(x2d, wq, wk, wv, mask)
    return out2d.reshape(B, T, H)


def _reference(x, wk, wq, wv):
    """Pure-JAX reference mirroring the PyTorch forward."""
    B, T, C = x.shape
    k = x @ wk
    q = x @ wq
    v = x @ wv
    wei = jnp.einsum("btd,bsd->bts", q, k) * C ** (-0.5)
    tril = jnp.tril(jnp.ones((T, T)))
    wei = jnp.where(tril == 0, -jnp.inf, wei)
    wei = jax.nn.softmax(wei, axis=-1)
    return wei @ v


if __name__ == "__main__":
    key = jax.random.PRNGKey(0)
    kx, kk, kq, kv = jax.random.split(key, 4)

    B, T, C, H = 2, BLOCK_SIZE, N_EMBD, HEAD_SIZE  # T <= block_size = 2
    x = jax.random.normal(kx, (B, T, C), dtype=jnp.float32)
    # nn.Linear(n_embd, head_size, bias=False) weights, stored as (C, H) = W.T
    wk = jax.random.normal(kk, (C, H), dtype=jnp.float32) * (C ** -0.5)
    wq = jax.random.normal(kq, (C, H), dtype=jnp.float32) * (C ** -0.5)
    wv = jax.random.normal(kv, (C, H), dtype=jnp.float32) * (C ** -0.5)

    out = head_forward(x, wk, wq, wv)
    out = jax.block_until_ready(out)

    ref = _reference(x, wk, wq, wv)
    assert out.shape == (B, T, H), out.shape
    assert jnp.allclose(out, ref, atol=1e-4, rtol=1e-4), "mismatch vs reference"

    print("KERNEL_OK")
</pallas_src>

<mosaic_0001>
module attributes {stable_mosaic.version = 11 : i64} {
  func.func @_head_kernel(%arg0: memref<4x16xf32, #tpu.memory_space<vmem>>, %arg1: memref<16x8xf32, #tpu.memory_space<vmem>>, %arg2: memref<16x8xf32, #tpu.memory_space<vmem>>, %arg3: memref<16x8xf32, #tpu.memory_space<vmem>>, %arg4: memref<4x4xf32, #tpu.memory_space<vmem>>, %arg5: memref<4x8xf32, #tpu.memory_space<vmem>>) attributes {dimension_semantics = [], scalar_prefetch = 0 : i64, scratch_operands = 0 : i64, tpu.core_type = #tpu.core_type<tc>} {
    %c0 = arith.constant 0 : index
    %c0_0 = arith.constant 0 : index
    %0 = vector.load %arg0[%c0, %c0_0] : memref<4x16xf32, #tpu.memory_space<vmem>>, vector<4x16xf32>
    %c0_1 = arith.constant 0 : index
    %c0_2 = arith.constant 0 : index
    %1 = vector.load %arg1[%c0_1, %c0_2] : memref<16x8xf32, #tpu.memory_space<vmem>>, vector<16x8xf32>
    %cst = arith.constant dense<0.000000e+00> : vector<4x8xf32>
    %2 = tpu.matmul %0, %1, %cst {dimension_numbers = #tpu.dot_dimension_numbers<[1], [0], [0], [1], [0, 0, 1, 1], [], []>} : vector<4x16xf32>, vector<16x8xf32>, vector<4x8xf32> -> vector<4x8xf32>
    %c0_3 = arith.constant 0 : index
    %c0_4 = arith.constant 0 : index
    %3 = vector.load %arg2[%c0_3, %c0_4] : memref<16x8xf32, #tpu.memory_space<vmem>>, vector<16x8xf32>
    %cst_5 = arith.constant dense<0.000000e+00> : vector<4x8xf32>
    %4 = tpu.matmul %0, %3, %cst_5 {dimension_numbers = #tpu.dot_dimension_numbers<[1], [0], [0], [1], [0, 0, 1, 1], [], []>} : vector<4x16xf32>, vector<16x8xf32>, vector<4x8xf32> -> vector<4x8xf32>
    %c0_6 = arith.constant 0 : index
    %c0_7 = arith.constant 0 : index
    %5 = vector.load %arg3[%c0_6, %c0_7] : memref<16x8xf32, #tpu.memory_space<vmem>>, vector<16x8xf32>
    %cst_8 = arith.constant dense<0.000000e+00> : vector<4x8xf32>
    %6 = tpu.matmul %0, %5, %cst_8 {dimension_numbers = #tpu.dot_dimension_numbers<[1], [0], [0], [1], [0, 0, 1, 1], [], []>} : vector<4x16xf32>, vector<16x8xf32>, vector<4x8xf32> -> vector<4x8xf32>
    %cst_9 = arith.constant dense<0.000000e+00> : vector<4x4xf32>
    %7 = tpu.matmul %2, %4, %cst_9 {dimension_numbers = #tpu.dot_dimension_numbers<[1], [1], [0], [0], [0, 0, 1, 0], [], []>} : vector<4x8xf32>, vector<4x8xf32>, vector<4x4xf32> -> vector<4x4xf32>
    %cst_10 = arith.constant 2.500000e-01 : f32
    %8 = vector.broadcast %cst_10 : f32 to vector<4x4xf32>
    %9 = arith.mulf %7, %8 : vector<4x4xf32>
    %c0_11 = arith.constant 0 : index
    %c0_12 = arith.constant 0 : index
    %10 = vector.load %arg4[%c0_11, %c0_12] : memref<4x4xf32, #tpu.memory_space<vmem>>, vector<4x4xf32>
    %cst_13 = arith.constant 0.000000e+00 : f32
    %11 = vector.broadcast %cst_13 : f32 to vector<4x4xf32>
    %12 = arith.cmpf ogt, %10, %11 : vector<4x4xf32>
    %cst_14 = arith.constant 0xFF800000 : f32
    %13 = vector.broadcast %cst_14 : f32 to vector<4x4xf32>
    %14 = arith.select %12, %9, %13 : vector<4x4xi1>, vector<4x4xf32>
    %cst_15 = arith.constant dense<0xFF800000> : vector<4xf32>
    %15 = vector.multi_reduction <maximumf>, %14, %cst_15 [1] : vector<4x4xf32> to vector<4xf32>
    %16 = vector.shape_cast %15 : vector<4xf32> to vector<4x1xf32>
    %17 = vector.broadcast %16 : vector<4x1xf32> to vector<4x4xf32>
    %18 = arith.subf %14, %17 : vector<4x4xf32>
    %19 = math.exp %18 : vector<4x4xf32>
    %cst_16 = arith.constant dense<0.000000e+00> : vector<4xf32>
    %20 = vector.multi_reduction <add>, %19, %cst_16 [1] : vector<4x4xf32> to vector<4xf32>
    %21 = vector.shape_cast %20 : vector<4xf32> to vector<4x1xf32>
    %22 = vector.broadcast %21 : vector<4x1xf32> to vector<4x4xf32>
    %23 = arith.divf %19, %22 : vector<4x4xf32>
    %cst_17 = arith.constant dense<0.000000e+00> : vector<4x8xf32>
    %24 = tpu.matmul %23, %6, %cst_17 {dimension_numbers = #tpu.dot_dimension_numbers<[1], [0], [0], [1], [0, 0, 1, 1], [], []>} : vector<4x4xf32>, vector<4x8xf32>, vector<4x8xf32> -> vector<4x8xf32>
    %c0_18 = arith.constant 0 : index
    %c0_19 = arith.constant 0 : index
    %25 = vector.load %arg5[%c0_18, %c0_19] : memref<4x8xf32, #tpu.memory_space<vmem>>, vector<4x8xf32>
    tpu.vector_store %arg5[%c0_18, %c0_19], %24 {strides = array<i32>} : memref<4x8xf32, #tpu.memory_space<vmem>>, vector<4x8xf32>,
    return
  }
}

</mosaic_0001>

<llo_original>
// kernel: tpu_custom_call.1
$region0: #{tpu_custom_call.1}
  #allocation0 [shape = 'u32[]', space=smem, size = 0x4, offset = 0x4, fixed_abs, tag = 'smem constant byte address 0x4 - core index']
  #allocation1 [shape = 'u32[144,128]{1,0:T(1,128)}', space=vmem, size = 0x12000, scoped, tag = 'internal scratch']
  %s0 = inlined_call_operand.vmem [shape: f32[4,16], index: 0, kind: input, shape index: {}]
  %s1 = inlined_call_operand.vmem [shape: f32[16,8], index: 1, kind: input, shape index: {}]
  %s2 = inlined_call_operand.vmem [shape: f32[16,8], index: 2, kind: input, shape index: {}]
  %s3 = inlined_call_operand.vmem [shape: f32[16,8], index: 3, kind: input, shape index: {}]
  %s4 = inlined_call_operand.vmem [shape: f32[4,4], index: 4, kind: input, shape index: {}]
  %s5 = inlined_call_operand.hbm [shape: f32[4,8], index: 5, kind: output, shape index: {}]
  %s6 = sld [smem:[#allocation0]]
  $region30: #{tpu_custom_call.1} parent=0
    _
  %s8 = ssub.s32 1, %s6
  %s9 = scalar_select 0, %s8, %s6
  $region1: #{tpu_custom_call.1} parent=0
    #allocation2 [shape = 'u8[2048]{0}', space=vmem, size = 0x800, scoped, tag = 'output window, operand 0, single buffered']
    #allocation3 [shape = 's32[1]{0}', space=sflag, size = 0x4, scoped, tag = 'scoped memory for tpu_custom_call.1']
    %10 = vsyncpa [#allocation3], 0
    // Predicated region
    $region2: #{tpu_custom_call.1} parent=1 // pred_check
      _
    $region3: #{tpu_custom_call.1} parent=1 // pred_check_branch
      %12 = sbr.rel (0) target = $region5
    $region4: #{tpu_custom_call.1} parent=1 // pred_region
      _
    $region5: #{tpu_custom_call.1} parent=1 // pred_fallthru
      _
    // Predicated region
    $region6: #{tpu_custom_call.1} parent=1 // pred_check
      _
    $region7: #{tpu_custom_call.1} parent=1 // pred_check_branch
      %14 = sbr.rel (0) target = $region9
    $region8: #{tpu_custom_call.1} parent=1 // pred_region
      _
    $region9: #{tpu_custom_call.1} parent=1 // pred_fallthru
      _
    // Predicated region
    $region10: #{tpu_custom_call.1} parent=1 // pred_check
      _
    $region11: #{tpu_custom_call.1} parent=1 // pred_check_branch
      %16 = sbr.rel (0) target = $region13
    $region12: #{tpu_custom_call.1} parent=1 // pred_region
      _
    $region13: #{tpu_custom_call.1} parent=1 // pred_fallthru
      _
    // Predicated region
    $region14: #{tpu_custom_call.1} parent=1 // pred_check
      _
    $region15: #{tpu_custom_call.1} parent=1 // pred_check_branch
      %18 = sbr.rel (0) target = $region17
    $region16: #{tpu_custom_call.1} parent=1 // pred_region
      _
    $region17: #{tpu_custom_call.1} parent=1 // pred_fallthru
      _
    // Predicated region
    $region18: #{tpu_custom_call.1} parent=1 // pred_check
      _
    $region19: #{tpu_custom_call.1} parent=1 // pred_check_branch
      %20 = sbr.rel (0) target = $region21
    $region20: #{tpu_custom_call.1} parent=1 // pred_region
      _
    $region21: #{tpu_custom_call.1} parent=1 // pred_fallthru
      _
    %v21 = vld [vmem:[%s0] sm:$0xf]
    %v22 = vld [vmem:[%s1] sm:$0xff]
    %v23 = vld [vmem:[%s1 + $0x8] sm:$0xff]
    %vm24 = vcmask 130048
    %v26 = vsel %vm24, %v21, 0
    %28 = vmatprep.subr.mxu0 0.0
    %29 = vmatpush1.msra.mxu0 %v22
    %30 = vmatprep.subr.mxu0 0.0
    %31 = vmatpush1.msra.mxu0 %v23
    %32 = vmatprep.subr.mxu0 0.0
    %33 = vmatpush1.msra.mxu0 0.0
    %34 = vmatprep.subr.mxu0 0.0
    %35 = vmatpush1.msra.mxu0 0.0
    %36 = vmatprep.subr.mxu0 0.0
    %37 = vmatpush1.msra.mxu0 0.0
    %38 = vmatprep.subr.mxu0 0.0
    %39 = vmatpush1.msra.mxu0 0.0
    %40 = vmatprep.subr.mxu0 0.0
    %41 = vmatpush1.msra.mxu0 0.0
    %42 = vmatprep.subr.mxu0 0.0
    %43 = vmatpush1.msra.mxu0 0.0
    %44 = vmatprep.subr.mxu0 0.0
    %45 = vmatpush1.msra.mxu0 0.0
    %46 = vmatprep.subr.mxu0 0.0
    %47 = vmatpush1.msra.mxu0 0.0
    %48 = vmatprep.subr.mxu0 0.0
    %49 = vmatpush1.msra.mxu0 0.0
    %50 = vmatprep.subr.mxu0 0.0
    %51 = vmatpush1.msra.mxu0 0.0
    %52 = vmatprep.subr.mxu0 0.0
    %53 = vmatpush1.msra.mxu0 0.0
    %54 = vmatprep.subr.mxu0 0.0
    %55 = vmatpush1.msra.mxu0 0.0
    %56 = vmatprep.subr.mxu0 0.0
    %57 = vmatpush1.msra.mxu0 0.0
    %58 = vmatprep.subr.mxu0 0.0
    %59 = vmatpush1.msra.mxu0 0.0
    %60 = vmatprep.subr.mxu0 0.0
    %61 = vmatpush1.msra.mxu0 0.0
    %62 = vmatprep.subr.mxu0 0.0
    %63 = vmatpush1.msra.mxu0 0.0
    %64 = vmatprep.subr.mxu0 0.0
    %65 = vmatpush1.msra.mxu0 0.0
    %66 = vmatprep.subr.mxu0 0.0
    %67 = vmatpush1.msra.mxu0 0.0
    %68 = vmatprep.subr.mxu0 0.0
    %69 = vmatpush1.msra.mxu0 0.0
    %70 = vmatprep.subr.mxu0 0.0
    %71 = vmatpush1.msra.mxu0 0.0
    %72 = vmatprep.subr.mxu0 0.0
    %73 = vmatpush1.msra.mxu0 0.0
    %74 = vmatprep.subr.mxu0 0.0
    %75 = vmatpush1.msra.mxu0 0.0
    %76 = vmatprep.subr.mxu0 0.0
    %77 = vmatpush1.msra.mxu0 0.0
    %78 = vmatprep.subr.mxu0 0.0
    %79 = vmatpush1.msra.mxu0 0.0
    %80 = vmatprep.subr.mxu0 0.0
    %81 = vmatpush1.msra.mxu0 0.0
    %82 = vmatprep.subr.mxu0 0.0
    %83 = vmatpush1.msra.mxu0 0.0
    %84 = vmatprep.subr.mxu0 0.0
    %85 = vmatpush1.msra.mxu0 0.0
    %86 = vmatprep.subr.mxu0 0.0
    %87 = vmatpush1.msra.mxu0 0.0
    %88 = vmatprep.subr.mxu0 0.0
    %89 = vmatpush1.msra.mxu0 0.0
    %90 = vmatprep.subr.mxu0 0.0
    %91 = vmatpush1.msra.mxu0 0.0
    %92 = vmatprep.mubr.f32.mxu0 0.0
    %93 = vmatmul.mubr.f32.gmra.mrb[0].mxu0 %v26
    %v94 = vpop.f32.mrb[0].mxu0
    %v95 = vadd.f32 0.0, %v94
    %v96 = vpop.f32.mrb[0].mxu0
    %97 = vdwg.mxu0
    %v98 = vld [vmem:[%s2] sm:$0xff]
    %v99 = vld [vmem:[%s2 + $0x8] sm:$0xff]
    %100 = vmatprep.subr.mxu0 0.0
    %101 = vmatpush1.msra.mxu0 %v98
    %102 = vmatprep.subr.mxu0 0.0
    %103 = vmatpush1.msra.mxu0 %v99
    %104 = vmatprep.subr.mxu0 0.0
    %105 = vmatpush1.msra.mxu0 0.0
    %106 = vmatprep.subr.mxu0 0.0
    %107 = vmatpush1.msra.mxu0 0.0
    %108 = vmatprep.subr.mxu0 0.0
    %109 = vmatpush1.msra.mxu0 0.0
    %110 = vmatprep.subr.mxu0 0.0
    %111 = vmatpush1.msra.mxu0 0.0
    %112 = vmatprep.subr.mxu0 0.0
    %113 = vmatpush1.msra.mxu0 0.0
    %114 = vmatprep.subr.mxu0 0.0
    %115 = vmatpush1.msra.mxu0 0.0
    %116 = vmatprep.subr.mxu0 0.0
    %117 = vmatpush1.msra.mxu0 0.0
    %118 = vmatprep.subr.mxu0 0.0
    %119 = vmatpush1.msra.mxu0 0.0
    %120 = vmatprep.subr.mxu0 0.0
    %121 = vmatpush1.msra.mxu0 0.0
    %122 = vmatprep.subr.mxu0 0.0
    %123 = vmatpush1.msra.mxu0 0.0
    %124 = vmatprep.subr.mxu0 0.0
    %125 = vmatpush1.msra.mxu0 0.0
    %126 = vmatprep.subr.mxu0 0.0
    %127 = vmatpush1.msra.mxu0 0.0
    %128 = vmatprep.subr.mxu0 0.0
    %129 = vmatpush1.msra.mxu0 0.0
    %130 = vmatprep.subr.mxu0 0.0
    %131 = vmatpush1.msra.mxu0 0.0
    %132 = vmatprep.subr.mxu0 0.0
    %133 = vmatpush1.msra.mxu0 0.0
    %134 = vmatprep.subr.mxu0 0.0
    %135 = vmatpush1.msra.mxu0 0.0
    %136 = vmatprep.subr.mxu0 0.0
    %137 = vmatpush1.msra.mxu0 0.0
    %138 = vmatprep.subr.mxu0 0.0
    %139 = vmatpush1.msra.mxu0 0.0
    %140 = vmatprep.subr.mxu0 0.0
    %141 = vmatpush1.msra.mxu0 0.0
    %142 = vmatprep.subr.mxu0 0.0
    %143 = vmatpush1.msra.mxu0 0.0
    %144 = vmatprep.subr.mxu0 0.0
    %145 = vmatpush1.msra.mxu0 0.0
    %146 = vmatprep.subr.mxu0 0.0
    %147 = vmatpush1.msra.mxu0 0.0
    %148 = vmatprep.subr.mxu0 0.0
    %149 = vmatpush1.msra.mxu0 0.0
    %150 = vmatprep.subr.mxu0 0.0
    %151 = vmatpush1.msra.mxu0 0.0
    %152 = vmatprep.subr.mxu0 0.0
    %153 = vmatpush1.msra.mxu0 0.0
    %154 = vmatprep.subr.mxu0 0.0
    %155 = vmatpush1.msra.mxu0 0.0
    %156 = vmatprep.subr.mxu0 0.0
    %157 = vmatpush1.msra.mxu0 0.0
    %158 = vmatprep.subr.mxu0 0.0
    %159 = vmatpush1.msra.mxu0 0.0
    %160 = vmatprep.subr.mxu0 0.0
    %161 = vmatpush1.msra.mxu0 0.0
    %162 = vmatprep.subr.mxu0 0.0
    %163 = vmatpush1.msra.mxu0 0.0
    %164 = vmatprep.mubr.f32.mxu0 0.0
    %165 = vmatmul.mubr.f32.gmra.mrb[0].mxu0 %v26
    %v166 = vpop.f32.mrb[0].mxu0
    %v167 = vadd.f32 0.0, %v166
    %v168 = vpop.f32.mrb[0].mxu0
    %169 = vdwg.mxu0
    %v170 = vld [vmem:[%s3] sm:$0xff]
    %v171 = vld [vmem:[%s3 + $0x8] sm:$0xff]
    %172 = vmatprep.subr.mxu0 0.0
    %173 = vmatpush1.msra.mxu0 %v170
    %174 = vmatprep.subr.mxu0 0.0
    %175 = vmatpush1.msra.mxu0 %v171
    %176 = vmatprep.subr.mxu0 0.0
    %177 = vmatpush1.msra.mxu0 0.0
    %178 = vmatprep.subr.mxu0 0.0
    %179 = vmatpush1.msra.mxu0 0.0
    %180 = vmatprep.subr.mxu0 0.0
    %181 = vmatpush1.msra.mxu0 0.0
    %182 = vmatprep.subr.mxu0 0.0
    %183 = vmatpush1.msra.mxu0 0.0
    %184 = vmatprep.subr.mxu0 0.0
    %185 = vmatpush1.msra.mxu0 0.0
    %186 = vmatprep.subr.mxu0 0.0
    %187 = vmatpush1.msra.mxu0 0.0
    %188 = vmatprep.subr.mxu0 0.0
    %189 = vmatpush1.msra.mxu0 0.0
    %190 = vmatprep.subr.mxu0 0.0
    %191 = vmatpush1.msra.mxu0 0.0
    %192 = vmatprep.subr.mxu0 0.0
    %193 = vmatpush1.msra.mxu0 0.0
    %194 = vmatprep.subr.mxu0 0.0
    %195 = vmatpush1.msra.mxu0 0.0
    %196 = vmatprep.subr.mxu0 0.0
    %197 = vmatpush1.msra.mxu0 0.0
    %198 = vmatprep.subr.mxu0 0.0
    %199 = vmatpush1.msra.mxu0 0.0
    %200 = vmatprep.subr.mxu0 0.0
    %201 = vmatpush1.msra.mxu0 0.0
    %202 = vmatprep.subr.mxu0 0.0
    %203 = vmatpush1.msra.mxu0 0.0
    %204 = vmatprep.subr.mxu0 0.0
    %205 = vmatpush1.msra.mxu0 0.0
    %206 = vmatprep.subr.mxu0 0.0
    %207 = vmatpush1.msra.mxu0 0.0
    %208 = vmatprep.subr.mxu0 0.0
    %209 = vmatpush1.msra.mxu0 0.0
    %210 = vmatprep.subr.mxu0 0.0
    %211 = vmatpush1.msra.mxu0 0.0
    %212 = vmatprep.subr.mxu0 0.0
    %213 = vmatpush1.msra.mxu0 0.0
    %214 = vmatprep.subr.mxu0 0.0
    %215 = vmatpush1.msra.mxu0 0.0
    %216 = vmatprep.subr.mxu0 0.0
    %217 = vmatpush1.msra.mxu0 0.0
    %218 = vmatprep.subr.mxu0 0.0
    %219 = vmatpush1.msra.mxu0 0.0
    %220 = vmatprep.subr.mxu0 0.0
    %221 = vmatpush1.msra.mxu0 0.0
    %222 = vmatprep.subr.mxu0 0.0
    %223 = vmatpush1.msra.mxu0 0.0
    %224 = vmatprep.subr.mxu0 0.0
    %225 = vmatpush1.msra.mxu0 0.0
    %226 = vmatprep.subr.mxu0 0.0
    %227 = vmatpush1.msra.mxu0 0.0
    %228 = vmatprep.subr.mxu0 0.0
    %229 = vmatpush1.msra.mxu0 0.0
    %230 = vmatprep.subr.mxu0 0.0
    %231 = vmatpush1.msra.mxu0 0.0
    %232 = vmatprep.subr.mxu0 0.0
    %233 = vmatpush1.msra.mxu0 0.0
    %234 = vmatprep.subr.mxu0 0.0
    %235 = vmatpush1.msra.mxu0 0.0
    %236 = vmatprep.mubr.f32.mxu0 0.0
    %237 = vmatmul.mubr.f32.gmra.mrb[0].mxu0 %v26
    %v238 = vpop.f32.mrb[0].mxu0
    %v239 = vadd.f32 0.0, %v238
    %v240 = vpop.f32.mrb[0].mxu0
    %241 = vdwg.mxu0
    %vm242 = vcmask 64512
    %v244 = vsel %vm242, %v95, 0
    %v247 = vsel %vm242, %v167, 0
    %249 = vmatprep.subr.mxu0 0.0
    %250 = vmatpush1.xpose.msra.mxu0 %v247
    %251 = vmatprep.subr.mxu0 0.0
    %252 = vmatpush1.xpose.msra.mxu0 0.0
    %253 = vmatprep.subr.mxu0 0.0
    %254 = vmatpush1.xpose.msra.mxu0 0.0
    %255 = vmatprep.subr.mxu0 0.0
    %256 = vmatpush1.xpose.msra.mxu0 0.0
    %257 = vmatprep.subr.mxu0 0.0
    %258 = vmatpush1.xpose.msra.mxu0 0.0
    %259 = vmatprep.subr.mxu0 0.0
    %260 = vmatpush1.xpose.msra.mxu0 0.0
    %261 = vmatprep.subr.mxu0 0.0
    %262 = vmatpush1.xpose.msra.mxu0 0.0
    %263 = vmatprep.subr.mxu0 0.0
    %264 = vmatpush1.xpose.msra.mxu0 0.0
    %265 = vmatprep.subr.mxu0 0.0
    %266 = vmatpush1.xpose.msra.mxu0 0.0
    %267 = vmatprep.subr.mxu0 0.0
    %268 = vmatpush1.xpose.msra.mxu0 0.0
    %269 = vmatprep.subr.mxu0 0.0
    %270 = vmatpush1.xpose.msra.mxu0 0.0
    %271 = vmatprep.subr.mxu0 0.0
    %272 = vmatpush1.xpose.msra.mxu0 0.0
    %273 = vmatprep.subr.mxu0 0.0
    %274 = vmatpush1.xpose.msra.mxu0 0.0
    %275 = vmatprep.subr.mxu0 0.0
    %276 = vmatpush1.xpose.msra.mxu0 0.0
    %277 = vmatprep.subr.mxu0 0.0
    %278 = vmatpush1.xpose.msra.mxu0 0.0
    %279 = vmatprep.subr.mxu0 0.0
    %280 = vmatpush1.xpose.msra.mxu0 0.0
    %281 = vmatprep.subr.mxu0 0.0
    %282 = vmatpush1.xpose.msra.mxu0 0.0
    %283 = vmatprep.subr.mxu0 0.0
    %284 = vmatpush1.xpose.msra.mxu0 0.0
    %285 = vmatprep.subr.mxu0 0.0
    %286 = vmatpush1.xpose.msra.mxu0 0.0
    %287 = vmatprep.subr.mxu0 0.0
    %288 = vmatpush1.xpose.msra.mxu0 0.0
    %289 = vmatprep.subr.mxu0 0.0
    %290 = vmatpush1.xpose.msra.mxu0 0.0
    %291 = vmatprep.subr.mxu0 0.0
    %292 = vmatpush1.xpose.msra.mxu0 0.0
    %293 = vmatprep.subr.mxu0 0.0
    %294 = vmatpush1.xpose.msra.mxu0 0.0
    %295 = vmatprep.subr.mxu0 0.0
    %296 = vmatpush1.xpose.msra.mxu0 0.0
    %297 = vmatprep.subr.mxu0 0.0
    %298 = vmatpush1.xpose.msra.mxu0 0.0
    %299 = vmatprep.subr.mxu0 0.0
    %300 = vmatpush1.xpose.msra.mxu0 0.0
    %301 = vmatprep.subr.mxu0 0.0
    %302 = vmatpush1.xpose.msra.mxu0 0.0
    %303 = vmatprep.subr.mxu0 0.0
    %304 = vmatpush1.xpose.msra.mxu0 0.0
    %305 = vmatprep.subr.mxu0 0.0
    %306 = vmatpush1.xpose.msra.mxu0 0.0
    %307 = vmatprep.subr.mxu0 0.0
    %308 = vmatpush1.xpose.msra.mxu0 0.0
    %309 = vmatprep.subr.mxu0 0.0
    %310 = vmatpush1.xpose.msra.mxu0 0.0
    %311 = vmatprep.subr.mxu0 0.0
    %312 = vmatpush1.xpose.msra.mxu0 0.0
    %313 = vmatprep.mubr.f32.mxu0 0.0
    %314 = vmatmul.mubr.f32.gmra.mrb[0].mxu0 %v244
    %v315 = vpop.f32.mrb[0].mxu0
    %v316 = vadd.f32 0.0, %v315
    %v317 = vpop.f32.mrb[0].mxu0
    %318 = vdwg.mxu0
    %v319 = vmul.f32 %v316, 0.25
    %v320 = vld [vmem:[%s4] sm:$0xf]
    %vm321 = vcmp.gt.f32.partialorder %v320, 0.0
    %v322 = vsel %vm321, %v319, -inf
    %vm323 = vcmask 27648
    %v324 = vsel %vm323, %v322, -inf
    %325 = vmax.xlane.f32.xlu0 %v324
    %v326 = vpop.xlane.xlu0 %325
    %v327 = vsub.f32 %v322, %v326
    %v328 = vmul.f32 %v327, 1.442695
    %v329 = vpow.pop %v328
    %v330 = vsel %vm323, %v329, 0.0
    %331 = vadd.xlane.f32.xlu0 %v330
    %v332 = vpop.xlane.xlu0 %331
    %v333 = vrcp.pop %v332
    %v334 = vmul.f32 %v329, %v333
    %vm335 = vcmask 31744
    %v337 = vsel %vm335, %v334, 0
    %vm339 = vcmask 1043456
    %v341 = vsel %vm339, %v239, 0
    %343 = vmatprep.subr.mxu0 0.0
    %344 = vmatpush1.msra.mxu0 %v341
    %345 = vmatprep.subr.mxu0 0.0
    %346 = vmatpush1.msra.mxu0 0.0
    %347 = vmatprep.subr.mxu0 0.0
    %348 = vmatpush1.msra.mxu0 0.0
    %349 = vmatprep.subr.mxu0 0.0
    %350 = vmatpush1.msra.mxu0 0.0
    %351 = vmatprep.subr.mxu0 0.0
    %352 = vmatpush1.msra.mxu0 0.0
    %353 = vmatprep.subr.mxu0 0.0
    %354 = vmatpush1.msra.mxu0 0.0
    %355 = vmatprep.subr.mxu0 0.0
    %356 = vmatpush1.msra.mxu0 0.0
    %357 = vmatprep.subr.mxu0 0.0
    %358 = vmatpush1.msra.mxu0 0.0
    %359 = vmatprep.subr.mxu0 0.0
    %360 = vmatpush1.msra.mxu0 0.0
    %361 = vmatprep.subr.mxu0 0.0
    %362 = vmatpush1.msra.mxu0 0.0
    %363 = vmatprep.subr.mxu0 0.0
    %364 = vmatpush1.msra.mxu0 0.0
    %365 = vmatprep.subr.mxu0 0.0
    %366 = vmatpush1.msra.mxu0 0.0
    %367 = vmatprep.subr.mxu0 0.0
    %368 = vmatpush1.msra.mxu0 0.0
    %369 = vmatprep.subr.mxu0 0.0
    %370 = vmatpush1.msra.mxu0 0.0
    %371 = vmatprep.subr.mxu0 0.0
    %372 = vmatpush1.msra.mxu0 0.0
    %373 = vmatprep.subr.mxu0 0.0
    %374 = vmatpush1.msra.mxu0 0.0
    %375 = vmatprep.subr.mxu0 0.0
    %376 = vmatpush1.msra.mxu0 0.0
    %377 = vmatprep.subr.mxu0 0.0
    %378 = vmatpush1.msra.mxu0 0.0
    %379 = vmatprep.subr.mxu0 0.0
    %380 = vmatpush1.msra.mxu0 0.0
    %381 = vmatprep.subr.mxu0 0.0
    %382 = vmatpush1.msra.mxu0 0.0
    %383 = vmatprep.subr.mxu0 0.0
    %384 = vmatpush1.msra.mxu0 0.0
    %385 = vmatprep.subr.mxu0 0.0
    %386 = vmatpush1.msra.mxu0 0.0
    %387 = vmatprep.subr.mxu0 0.0
    %388 = vmatpush1.msra.mxu0 0.0
    %389 = vmatprep.subr.mxu0 0.0
    %390 = vmatpush1.msra.mxu0 0.0
    %391 = vmatprep.subr.mxu0 0.0
    %392 = vmatpush1.msra.mxu0 0.0
    %393 = vmatprep.subr.mxu0 0.0
    %394 = vmatpush1.msra.mxu0 0.0
    %395 = vmatprep.subr.mxu0 0.0
    %396 = vmatpush1.msra.mxu0 0.0
    %397 = vmatprep.subr.mxu0 0.0
    %398 = vmatpush1.msra.mxu0 0.0
    %399 = vmatprep.subr.mxu0 0.0
    %400 = vmatpush1.msra.mxu0 0.0
    %401 = vmatprep.subr.mxu0 0.0
    %402 = vmatpush1.msra.mxu0 0.0
    %403 = vmatprep.subr.mxu0 0.0
    %404 = vmatpush1.msra.mxu0 0.0
    %405 = vmatprep.subr.mxu0 0.0
    %406 = vmatpush1.msra.mxu0 0.0
    %407 = vmatprep.mubr.f32.mxu0 0.0
    %408 = vmatmul.mubr.f32.gmra.mrb[0].mxu0 %v337
    %v409 = vpop.f32.mrb[0].mxu0
    %v410 = vadd.f32 0.0, %v409
    %v411 = vpop.f32.mrb[0].mxu0
    %412 = vdwg.mxu0
    %vm413 = vcmask 60416
    %414 = vst.msk [vmem:[#allocation2] sm:$0xf] %vm413, %v410
    // Predicated region
    $region22: #{tpu_custom_call.1} parent=1 // pred_check
      _
    $region23: #{tpu_custom_call.1} parent=1 // pred_check_branch
      %416 = sbr.rel (0) target = $region25
    $region24: #{tpu_custom_call.1} parent=1 // pred_region
      %s418 = ssub.s32 64, 64
      %419 = vsyncadd [#allocation3], %s418
      %s421 = sshll.u32 [#allocation2], 4
      %s422 = int_to_ptr.vmem [resolvable:$true] %s421
      %424 = dma.vmem_to_hbm [thread:$0]  %s422, 64, %s5, [#allocation3]
    $region25: #{tpu_custom_call.1} parent=1 // pred_fallthru
      _
    // Predicated region
    $region26: #{tpu_custom_call.1} parent=1 // pred_check
      _
    $region27: #{tpu_custom_call.1} parent=1 // pred_check_branch
      %426 = sbr.rel (0) target = $region29
    $region28: #{tpu_custom_call.1} parent=1 // pred_region
      %427 = dma.done [#allocation3], 64
    $region29: #{tpu_custom_call.1} parent=1 // pred_fallthru
      _
    %428 = vsyncpa [#allocation3], 1

</llo_original>
